<compile_context>
chip_gen: v7x
topology: tpu7x:2x2x1
jax: 0.10.0
libtpu: 0.0.40
codegen_flags: <defaults>
</compile_context>

<pallas_src>
import functools

import jax
import jax.numpy as jnp
from jax.experimental import pallas as pl
from jax.experimental.pallas import tpu as pltpu


def _layernorm_kernel(x_ref, w_ref, b_ref, o_ref, *, eps, hidden):
    # x_ref: (TM, H) tile of rows; w_ref/b_ref: (1, H) f32; o_ref: (TM, H)
    x = x_ref[...].astype(jnp.float32)
    inv_h = 1.0 / float(hidden)

    # Fused single-pass statistics (both reductions are independent -> the
    # XLU handles them back-to-back with no serial VALU dependency).
    s1 = jnp.sum(x, axis=-1, keepdims=True)
    s2 = jnp.sum(x * x, axis=-1, keepdims=True)
    mean = s1 * inv_h
    var = jnp.maximum(s2 * inv_h - mean * mean, 0.0)   # biased variance, clamped
    inv = jax.lax.rsqrt(var + eps)                     # EUP

    w32 = w_ref[...]   # already f32; grid-invariant block stays resident
    b32 = b_ref[...]
    y = (x - mean) * (inv * w32) + b32
    o_ref[...] = y.astype(o_ref.dtype)


def _sublane_pack(dtype):
    """Rows per vreg sublane group for this dtype (8 f32 / 16 bf16 / 32 int8-fp8)."""
    bits = jnp.dtype(dtype).itemsize * 8
    if bits >= 32:
        return 8
    if bits == 16:
        return 16
    return 32


def layer_norm(x, weight, bias, eps=1e-05, *, block_rows=None,
               vmem_budget_bytes=16 * 1024 * 1024):
    """x: (..., H); weight/bias: (H,). Returns same shape/dtype as x."""
    orig_shape = x.shape
    H = orig_shape[-1]
    rows = 1
    for d in orig_shape[:-1]:
        rows *= d
    x2 = x.reshape(rows, H)   # free on a contiguous layout

    pack = _sublane_pack(x.dtype)
    in_bytes = jnp.dtype(x.dtype).itemsize

    if block_rows is None:
        # Double-buffered input + output tiles: ~4 * tm * H * bytes of VMEM.
        tm = vmem_budget_bytes // (4 * H * in_bytes)
        tm = max(pack, min(int(tm), 1024))
        # Don't make the block (much) larger than the problem.
        rows_rounded = ((rows + pack - 1) // pack) * pack
        tm = min(tm, rows_rounded)
    else:
        tm = block_rows
    tm = max(pack, (tm // pack) * pack)   # sublane-packed block height

    grid = (pl.cdiv(rows, tm),)           # ragged last block handled by Pallas

    # Pre-cast params to f32 once in the wrapper (negligible HBM: just (H,)).
    w2 = weight.reshape(1, H).astype(jnp.float32)
    b2 = bias.reshape(1, H).astype(jnp.float32)

    cost = pl.CostEstimate(
        flops=7 * rows * H,
        transcendentals=rows,
        bytes_accessed=2 * rows * H * in_bytes + 2 * H * 4,
    )

    kernel = functools.partial(_layernorm_kernel, eps=float(eps), hidden=H)

    out = pl.pallas_call(
        kernel,
        out_shape=jax.ShapeDtypeStruct((rows, H), x.dtype),
        grid_spec=pltpu.PrefetchScalarGridSpec(
            num_scalar_prefetch=0,
            grid=grid,
            in_specs=[
                pl.BlockSpec((tm, H), lambda i: (i, 0)),
                pl.BlockSpec((1, H), lambda i: (0, 0)),
                pl.BlockSpec((1, H), lambda i: (0, 0)),
            ],
            out_specs=pl.BlockSpec((tm, H), lambda i: (i, 0)),
        ),
        compiler_params=pltpu.CompilerParams(
            dimension_semantics=("parallel",),
            vmem_limit_bytes=32 * 1024 * 1024,
        ),
        cost_estimate=cost,
    )(x2, w2, b2)

    return out.reshape(orig_shape)


def _reference(x, weight, bias, eps):
    mean = jnp.mean(x, axis=-1, keepdims=True)
    var = jnp.mean((x - mean) ** 2, axis=-1, keepdims=True)
    return weight * ((x - mean) / jnp.sqrt(var + eps)) + bias


if __name__ == "__main__":
    key = jax.random.PRNGKey(0)
    batch, seq, hidden = 2, 8, 128
    eps = 1e-05

    x = jax.random.normal(key, (batch, seq, hidden), dtype=jnp.float32)
    # Parameters as in nn.Module __init__: weight=ones(hidden), bias=zeros(hidden),
    # perturbed deterministically so the affine part is exercised.
    k1, k2 = jax.random.split(key)
    weight = jnp.ones((hidden,), jnp.float32) + 0.1 * jax.random.normal(k1, (hidden,), jnp.float32)
    bias = jnp.zeros((hidden,), jnp.float32) + 0.1 * jax.random.normal(k2, (hidden,), jnp.float32)

    out = layer_norm(x, weight, bias, eps)
    out = jax.block_until_ready(out)
    ref = _reference(x, weight, bias, eps)
    assert out.shape == x.shape and out.dtype == x.dtype
    assert jnp.allclose(out, ref, atol=3e-5, rtol=1e-5), "mismatch vs reference"

    # Ragged-grid path (rows not a multiple of the block): masked writes on the
    # last block, no padding copies in the wrapper.
    x_r = jax.random.normal(k2, (3, 5, hidden), dtype=jnp.float32)
    out_r = layer_norm(x_r, weight, bias, eps, block_rows=8)
    out_r = jax.block_until_ready(out_r)
    ref_r = _reference(x_r, weight, bias, eps)
    assert jnp.allclose(out_r, ref_r, atol=3e-5, rtol=1e-5), "ragged-grid mismatch"

    # bf16 path exercises the 16-row sublane packing and output cast.
    x_bf = x.astype(jnp.bfloat16)
    out_bf = jax.block_until_ready(layer_norm(x_bf, weight, bias, eps))
    ref_bf = _reference(x_bf.astype(jnp.float32), weight, bias, eps)
    assert out_bf.dtype == jnp.bfloat16
    assert jnp.allclose(out_bf.astype(jnp.float32), ref_bf, atol=3e-2, rtol=3e-2), "bf16 mismatch"

    print("KERNEL_OK")
</pallas_src>

<mosaic_0001>
module attributes {stable_mosaic.version = 11 : i64} {
  func.func @_layernorm_kernel(%arg0: i32, %arg1: memref<16x128xf32, #tpu.memory_space<vmem>>, %arg2: memref<1x128xf32, #tpu.memory_space<vmem>>, %arg3: memref<1x128xf32, #tpu.memory_space<vmem>>, %arg4: memref<16x128xf32, #tpu.memory_space<vmem>>) attributes {dimension_semantics = [#tpu.dimension_semantics<parallel>], iteration_bounds = array<i64: 1>, scalar_prefetch = 0 : i64, scratch_operands = 0 : i64, tpu.core_type = #tpu.core_type<tc>, window_params = [{transform_indices = @transform_0, window_bounds = array<i64: 16, 128>}, {pipeline_mode = #tpu.pipeline_mode<synchronous>, transform_indices = @transform_1, window_bounds = array<i64: 1, 128>}, {pipeline_mode = #tpu.pipeline_mode<synchronous>, transform_indices = @transform_2, window_bounds = array<i64: 1, 128>}, {transform_indices = @transform_3, window_bounds = array<i64: 16, 128>}]} {
    %c0 = arith.constant 0 : index
    %c0_0 = arith.constant 0 : index
    %0 = vector.load %arg1[%c0, %c0_0] : memref<16x128xf32, #tpu.memory_space<vmem>>, vector<16x128xf32>
    %cst = arith.constant dense<0.000000e+00> : vector<16xf32>
    %1 = vector.multi_reduction <add>, %0, %cst [1] : vector<16x128xf32> to vector<16xf32>
    %2 = vector.shape_cast %1 : vector<16xf32> to vector<16x1xf32>
    %3 = arith.mulf %0, %0 : vector<16x128xf32>
    %cst_1 = arith.constant dense<0.000000e+00> : vector<16xf32>
    %4 = vector.multi_reduction <add>, %3, %cst_1 [1] : vector<16x128xf32> to vector<16xf32>
    %5 = vector.shape_cast %4 : vector<16xf32> to vector<16x1xf32>
    %cst_2 = arith.constant 7.812500e-03 : f32
    %6 = vector.broadcast %cst_2 : f32 to vector<16x1xf32>
    %7 = arith.mulf %2, %6 : vector<16x1xf32>
    %cst_3 = arith.constant 7.812500e-03 : f32
    %8 = vector.broadcast %cst_3 : f32 to vector<16x1xf32>
    %9 = arith.mulf %5, %8 : vector<16x1xf32>
    %10 = arith.mulf %7, %7 : vector<16x1xf32>
    %11 = arith.subf %9, %10 : vector<16x1xf32>
    %cst_4 = arith.constant 0.000000e+00 : f32
    %12 = vector.broadcast %cst_4 : f32 to vector<16x1xf32>
    %13 = arith.maximumf %11, %12 : vector<16x1xf32>
    %cst_5 = arith.constant 9.99999974E-6 : f32
    %14 = vector.broadcast %cst_5 : f32 to vector<16x1xf32>
    %15 = arith.addf %13, %14 : vector<16x1xf32>
    %16 = math.rsqrt %15 : vector<16x1xf32>
    %c0_6 = arith.constant 0 : index
    %c0_7 = arith.constant 0 : index
    %17 = vector.load %arg2[%c0_6, %c0_7] : memref<1x128xf32, #tpu.memory_space<vmem>>, vector<1x128xf32>
    %c0_8 = arith.constant 0 : index
    %c0_9 = arith.constant 0 : index
    %18 = vector.load %arg3[%c0_8, %c0_9] : memref<1x128xf32, #tpu.memory_space<vmem>>, vector<1x128xf32>
    %19 = vector.broadcast %7 : vector<16x1xf32> to vector<16x128xf32>
    %20 = arith.subf %0, %19 : vector<16x128xf32>
    %21 = vector.broadcast %16 : vector<16x1xf32> to vector<16x128xf32>
    %22 = vector.broadcast %17 : vector<1x128xf32> to vector<16x128xf32>
    %23 = arith.mulf %21, %22 : vector<16x128xf32>
    %24 = arith.mulf %20, %23 : vector<16x128xf32>
    %25 = vector.broadcast %18 : vector<1x128xf32> to vector<16x128xf32>
    %26 = arith.addf %24, %25 : vector<16x128xf32>
    %c0_10 = arith.constant 0 : index
    %c0_11 = arith.constant 0 : index
    %27 = vector.load %arg4[%c0_10, %c0_11] : memref<16x128xf32, #tpu.memory_space<vmem>>, vector<16x128xf32>
    tpu.vector_store %arg4[%c0_10, %c0_11], %26 {strides = array<i32>} : memref<16x128xf32, #tpu.memory_space<vmem>>, vector<16x128xf32>,
    return
  }
  func.func @transform_0(%arg0: i32) -> (i32, i32) {
    %c0_i32 = arith.constant 0 : i32
    %c0_i32_0 = arith.constant 0 : i32
    return %arg0, %c0_i32 : i32, i32
  }
  func.func @transform_1(%arg0: i32) -> (i32, i32) {
    %c0_i32 = arith.constant 0 : i32
    %c0_i32_0 = arith.constant 0 : i32
    %c0_i32_1 = arith.constant 0 : i32
    return %c0_i32, %c0_i32_0 : i32, i32
  }
  func.func @transform_2(%arg0: i32) -> (i32, i32) {
    %c0_i32 = arith.constant 0 : i32
    %c0_i32_0 = arith.constant 0 : i32
    %c0_i32_1 = arith.constant 0 : i32
    return %c0_i32, %c0_i32_0 : i32, i32
  }
  func.func @transform_3(%arg0: i32) -> (i32, i32) {
    %c0_i32 = arith.constant 0 : i32
    %c0_i32_0 = arith.constant 0 : i32
    return %arg0, %c0_i32 : i32, i32
  }
}

</mosaic_0001>

<llo_original>
// kernel: tpu_custom_call.1
$region0: #{tpu_custom_call.1}
  #allocation0 [shape = 'u32[]', space=smem, size = 0x4, offset = 0x4, fixed_abs, tag = 'smem constant byte address 0x4 - core index']
  #allocation1 [shape = 'u32[144,128]{1,0:T(1,128)}', space=vmem, size = 0x12000, scoped, tag = 'internal scratch']
  %s0 = inlined_call_operand.hbm [shape: f32[16,128], index: 0, kind: input, shape index: {}]
  %s1 = inlined_call_operand.vmem [shape: f32[1,128], index: 1, kind: input, shape index: {}]
  %s2 = inlined_call_operand.vmem [shape: f32[1,128], index: 2, kind: input, shape index: {}]
  %s3 = inlined_call_operand.hbm [shape: f32[16,128], index: 3, kind: output, shape index: {}]
  %s4 = sld [smem:[#allocation0]]
  $region26: #{tpu_custom_call.1} parent=0
    _
  %s6 = ssub.s32 1, %s4
  %s7 = scalar_select 0, %s6, %s4
  $region1: #{tpu_custom_call.1} parent=0
    #allocation2 [shape = 'u8[8192]{0}', space=vmem, size = 0x2000, scoped, tag = 'input window, operand 0, single buffered']
    #allocation3 [shape = 's32[1]{0}', space=sflag, size = 0x4, scoped, tag = 'scoped memory for tpu_custom_call.1']
    #allocation4 [shape = 's32[1]{0}', space=sflag, size = 0x4, scoped, tag = 'scoped memory for tpu_custom_call.1']
    #allocation5 [shape = 'u8[8192]{0}', space=vmem, size = 0x2000, scoped, tag = 'output window, operand 0, single buffered']
    %8 = vsyncpa [#allocation3], 0
    %9 = vsyncpa [#allocation4], 0
    // Predicated region
    $region2: #{tpu_custom_call.1} parent=1 // pred_check
      _
    $region3: #{tpu_custom_call.1} parent=1 // pred_check_branch
      %11 = sbr.rel (0) target = $region5
    $region4: #{tpu_custom_call.1} parent=1 // pred_region
      %s13 = ssub.s32 256, 256
      %14 = vsyncadd [#allocation3], %s13
      %s15 = sshll.u32 [#allocation2], 4
      %s16 = int_to_ptr.vmem [resolvable:$true] %s15
      %21 = dma.hbm_to_vmem [thread:$0]  %s0, 256, %s16, [#allocation3], 128, 128, 8
    $region5: #{tpu_custom_call.1} parent=1 // pred_fallthru
      _
    // Predicated region
    $region6: #{tpu_custom_call.1} parent=1 // pred_check
      _
    $region7: #{tpu_custom_call.1} parent=1 // pred_check_branch
      %23 = sbr.rel (0) target = $region9
    $region8: #{tpu_custom_call.1} parent=1 // pred_region
      _
    $region9: #{tpu_custom_call.1} parent=1 // pred_fallthru
      _
    // Predicated region
    $region10: #{tpu_custom_call.1} parent=1 // pred_check
      _
    $region11: #{tpu_custom_call.1} parent=1 // pred_check_branch
      %25 = sbr.rel (0) target = $region13
    $region12: #{tpu_custom_call.1} parent=1 // pred_region
      _
    $region13: #{tpu_custom_call.1} parent=1 // pred_fallthru
      _
    // Predicated region
    $region14: #{tpu_custom_call.1} parent=1 // pred_check
      _
    $region15: #{tpu_custom_call.1} parent=1 // pred_check_branch
      %27 = sbr.rel (0) target = $region17
    $region16: #{tpu_custom_call.1} parent=1 // pred_region
      %28 = dma.done [#allocation3], 256
    $region17: #{tpu_custom_call.1} parent=1 // pred_fallthru
      _
    %v29 = vld [vmem:[#allocation2] sm:$0xff]
    %v30 = vld [vmem:[#allocation2 + $0x8] sm:$0xff]
    %31 = vadd.xlane.f32.xlu0 %v29
    %v32 = vpop.xlane.xlu0 %31
    %33 = vadd.xlane.f32.xlu0 %v30
    %v34 = vpop.xlane.xlu0 %33
    %v35 = vmul.f32 %v29, %v29
    %v36 = vmul.f32 %v30, %v30
    %37 = vadd.xlane.f32.xlu0 %v35
    %v38 = vpop.xlane.xlu0 %37
    %39 = vadd.xlane.f32.xlu0 %v36
    %v40 = vpop.xlane.xlu0 %39
    %v41 = vmul.f32 %v32, 0.0078125
    %v42 = vmul.f32 %v34, 0.0078125
    %v43 = vmul.f32 %v38, 0.0078125
    %v44 = vmul.f32 %v40, 0.0078125
    %v45 = vmul.f32 %v41, %v41
    %v46 = vmul.f32 %v42, %v42
    %v47 = vsub.f32 %v43, %v45
    %v48 = vsub.f32 %v44, %v46
    %v49 = vmax.f32 %v47, 0.0
    %v50 = vmax.f32 %v48, 0.0
    %v51 = vadd.f32 %v49, 1e-05
    %v52 = vadd.f32 %v50, 1e-05
    %v53 = vrsqrt.pop %v51
    %v54 = vrsqrt.pop %v52
    %v55 = vld [vmem:[%s1] sm:$0x1]
    %v56 = vld [vmem:[%s2] sm:$0x1]
    %v57 = vsub.f32 %v29, %v41
    %v58 = vsub.f32 %v30, %v42
    %v60 = vlaneseq
    %v61 = vshrl.u32 %v60, 7
    %v62 = vsub.s32 0, %v61
    %v63 = vrot.slane %v55, %v62
    %v65 = vmul.f32 %v53, %v63
    %v66 = vmul.f32 %v54, %v63
    %v67 = vmul.f32 %v57, %v65
    %v68 = vmul.f32 %v58, %v66
    %v70 = vlaneseq
    %v71 = vshrl.u32 %v70, 7
    %v72 = vsub.s32 0, %v71
    %v73 = vrot.slane %v56, %v72
    %v75 = vadd.f32 %v67, %v73
    %v76 = vadd.f32 %v68, %v73
    %77 = vst [vmem:[#allocation5] sm:$0xff] %v75
    %78 = vst [vmem:[#allocation5 + $0x8] sm:$0xff] %v76
    // Predicated region
    $region18: #{tpu_custom_call.1} parent=1 // pred_check
      _
    $region19: #{tpu_custom_call.1} parent=1 // pred_check_branch
      %80 = sbr.rel (0) target = $region21
    $region20: #{tpu_custom_call.1} parent=1 // pred_region
      %s82 = ssub.s32 256, 256
      %83 = vsyncadd [#allocation4], %s82
      %s84 = sshll.u32 [#allocation5], 4
      %s85 = int_to_ptr.vmem [resolvable:$true] %s84
      %90 = dma.vmem_to_hbm [thread:$0]  %s85, 256, %s3, [#allocation4], 128, 128, 8
    $region21: #{tpu_custom_call.1} parent=1 // pred_fallthru
      _
    // Predicated region
    $region22: #{tpu_custom_call.1} parent=1 // pred_check
      _
    $region23: #{tpu_custom_call.1} parent=1 // pred_check_branch
      %92 = sbr.rel (0) target = $region25
    $region24: #{tpu_custom_call.1} parent=1 // pred_region
      %93 = dma.done [#allocation4], 256
    $region25: #{tpu_custom_call.1} parent=1 // pred_fallthru
      _
    %94 = vsyncpa [#allocation3], 1
    %95 = vsyncpa [#allocation4], 1

</llo_original>
